<compile_context>
chip_gen: v5e
topology: v5e:2x2
jax: 0.10.0
libtpu: 0.0.40
codegen_flags: <defaults>
</compile_context>

<pallas_src>
import functools

import jax
import jax.numpy as jnp
import numpy as np
from jax.experimental import pallas as pl
from jax.experimental.pallas import tpu as pltpu

_LANES = 128  # lane width of every packed weight block and of the output slab


def _pad8(n):
    return ((n + 7) // 8) * 8


def _round_up(n, m):
    return ((n + m - 1) // m) * m


# ----------------------------------------------------------------------------
# Kernel
# ----------------------------------------------------------------------------
def _critic_double_kernel(s1_ref, s2_ref, u_ref, wb1_ref, wb2_ref, p_ref, out_ref, *,
                          layout, t1, t2, h1_dim, h2_dim):
    f32 = jnp.float32
    SW = h1_dim + h2_dim
    SWp = _pad8(SW)                       # gate-lane stride of the fused [i|f|g|o] layout

    def W(name):                          # full-tile (8k, 128) view of the slab
        r0, nrp = layout[name]
        return p_ref[r0:r0 + nrp, :]

    def Wb(name):                         # (1, 128) bias row
        return W(name)[0:1, :]

    s1 = s1_ref[...]                      # (B, pad8(t1*o1+1)); trailing const-1 feature
    s2 = s2_ref[...]                      # (B, pad8(t2*o2+1))
    u = u_ref[...]                        # (B, pad8(adim)), zero-padded features
    B = s1.shape[0]

    # One block-diagonal matmul per LSTM: column block t (128 lanes) holds the
    # gate pre-activations of timestep t with the bias already folded in (via
    # the const-1 feature); the final 128-block is the backward-direction step
    # on x[T-1].
    gx1 = jnp.dot(s1, wb1_ref[...], preferred_element_type=f32)   # (B, (t1+1)*128)
    gx2 = jnp.dot(s2, wb2_ref[...], preferred_element_type=f32)   # (B, (t2+1)*128)

    # Fused forward recurrence over BOTH LSTMs.  Exactness requires:
    #   (a) whh cross blocks and the inactive LSTM's gate lanes in gx are
    #       exactly zero (asserted in pack_params), and
    #   (b) NO standalone bias is added to `gates` -- all biases ride in gx.
    whh = W("whh")                        # (SWp, 128), block-structured
    T = max(t1, t2)
    st1, st2 = T - t1, T - t2
    h = jnp.zeros((B, SWp), f32)
    c = jnp.zeros((B, SWp), f32)
    # TODO(synk): for large T switch to lax.fori_loop(unroll=4-8) + VMEM gx scratch.
    for t in range(T):                    # small static trip count -> unrolled
        gx = None
        if t >= st1:
            k = t - st1
            gx = gx1[:, k * _LANES:(k + 1) * _LANES]
        if t >= st2:
            k = t - st2
            g2 = gx2[:, k * _LANES:(k + 1) * _LANES]
            gx = g2 if gx is None else gx + g2
        gates = gx + jnp.dot(h, whh, preferred_element_type=f32)   # (B, 128)
        sg = jax.nn.sigmoid(gates)        # whole-slab EUP (unused lanes discarded)
        th = jnp.tanh(gates)
        c = sg[:, SWp:2 * SWp] * c + sg[:, 0:SWp] * th[:, 2 * SWp:3 * SWp]
        h = sg[:, 3 * SWp:4 * SWp] * jnp.tanh(c)

    # Backward direction: one step on x[T-1] from zero initial state.  Only
    # r_out[:, -1, :] is consumed downstream, so this is exact; Whh_b is
    # mathematically dead and never packed.
    gb = gx1[:, t1 * _LANES:(t1 + 1) * _LANES] + gx2[:, t2 * _LANES:(t2 + 1) * _LANES]
    sgb = jax.nn.sigmoid(gb)
    thb = jnp.tanh(gb)
    hb = sgb[:, 3 * SWp:4 * SWp] * jnp.tanh(sgb[:, 0:SWp] * thb[:, 2 * SWp:3 * SWp])

    # Fused per-LSTM fc layers -> s = [s1_enc | s2_enc | 0...] over 128 lanes.
    s = (jnp.dot(h, W("wfcf"), preferred_element_type=f32)
         + jnp.dot(hb, W("wfcb"), preferred_element_type=f32) + Wb("bfc"))

    # Fused twin critic heads: [l1 || l4], blockdiag(l2, l5), l3/l6 -> lanes 0/1.
    z = jnp.maximum(jnp.dot(s, W("wl1s"), preferred_element_type=f32)
                    + jnp.dot(u, W("wl1u"), preferred_element_type=f32)
                    + Wb("bl1"), 0.0)
    z = jnp.maximum(jnp.dot(z, W("wl2"), preferred_element_type=f32) + Wb("bl2"), 0.0)
    out_ref[...] = jnp.dot(z, W("wl3"), preferred_element_type=f32) + Wb("bl3")


# ----------------------------------------------------------------------------
# Host-side parameter packing (done once at init, not per call)
# ----------------------------------------------------------------------------
def pack_params(p, *, t1, t2):
    """Fuses & packs the logical per-matrix params into a (rows,128) slab plus
    two block-diagonal input-projection weights (one per LSTM)."""
    # TODO(synk): t1==1 / t2==1 passthrough branch (no LSTM encoder) not implemented.
    assert t1 > 1 and t2 > 1
    H1, H2 = p["whh_f1"].shape[0], p["whh_f2"].shape[0]
    s1d, s2d = p["wfc_f1"].shape[1], p["wfc_f2"].shape[1]
    h0, h1 = p["w2"].shape[0], p["w2"].shape[1]
    o1, o2 = p["wih_f1"].shape[0], p["wih_f2"].shape[0]
    adim = p["w1u"].shape[0]
    SW = H1 + H2
    SWp = _pad8(SW)
    assert 4 * SWp <= _LANES, "fused gate layout requires 4*pad8(H1+H2) <= 128"
    # TODO(synk): widen slab packing for feature dims > 128.
    assert s1d + s2d <= _LANES and 2 * h0 <= _LANES and 2 * h1 <= _LANES
    A = lambda k: np.asarray(p[k], np.float32)

    def gate_cols(w, H, off):
        # (rows, 4H) in [i f g o] order -> (rows, 128), interleaved, stride SWp.
        out = np.zeros((w.shape[0], _LANES), np.float32)
        for k in range(4):
            out[:, k * SWp + off:k * SWp + off + H] = w[:, k * H:(k + 1) * H]
        return out

    def big_w(wih_f, b_f, wih_b, b_b, H, off, t, o):
        # Block-diagonal (pad8(t*o+1), (t+1)*128): block k = forward projection
        # of timestep k, last block = backward step on x[t-1]; the const-1 input
        # row (index t*o) carries the per-timestep biases.
        rows = _pad8(t * o + 1)
        Wg = np.zeros((rows, (t + 1) * _LANES), np.float32)
        gf, bf = gate_cols(wih_f, H, off), gate_cols(b_f, H, off)
        for k in range(t):
            Wg[k * o:(k + 1) * o, k * _LANES:(k + 1) * _LANES] = gf
            Wg[t * o, k * _LANES:(k + 1) * _LANES] = bf[0]
        Wg[(t - 1) * o:t * o, t * _LANES:(t + 1) * _LANES] = gate_cols(wih_b, H, off)
        Wg[t * o, t * _LANES:(t + 1) * _LANES] = gate_cols(b_b, H, off)[0]
        return Wg

    wbig1 = big_w(A("wih_f1"), A("b_f1"), A("wih_b1"), A("b_b1"), H1, 0, t1, o1)
    wbig2 = big_w(A("wih_f2"), A("b_f2"), A("wih_b2"), A("b_b2"), H2, H1, t2, o2)

    fused = {}
    whh = np.zeros((SWp, _LANES), np.float32)
    whh[:H1] = gate_cols(A("whh_f1"), H1, 0)
    whh[H1:SW] = gate_cols(A("whh_f2"), H2, H1)
    fused["whh"] = whh
    wfcf = np.zeros((SWp, _LANES), np.float32)
    wfcf[:H1, :s1d] = A("wfc_f1"); wfcf[H1:SW, s1d:s1d + s2d] = A("wfc_f2")
    wfcb = np.zeros((SWp, _LANES), np.float32)
    wfcb[:H1, :s1d] = A("wfc_b1"); wfcb[H1:SW, s1d:s1d + s2d] = A("wfc_b2")
    fused["wfcf"], fused["wfcb"] = wfcf, wfcb
    bfc = np.zeros((1, _LANES), np.float32)
    bfc[0, :s1d] = A("b_fc1")[0]; bfc[0, s1d:s1d + s2d] = A("b_fc2")[0]
    fused["bfc"] = bfc
    wl1s = np.zeros((_LANES, _LANES), np.float32)
    wl1s[:s1d, :h0] = A("w1s1"); wl1s[:s1d, h0:2 * h0] = A("w4s1")
    wl1s[s1d:s1d + s2d, :h0] = A("w1s2"); wl1s[s1d:s1d + s2d, h0:2 * h0] = A("w4s2")
    fused["wl1s"] = wl1s
    wl1u = np.zeros((_pad8(adim), _LANES), np.float32)
    wl1u[:adim, :h0] = A("w1u"); wl1u[:adim, h0:2 * h0] = A("w4u")
    fused["wl1u"] = wl1u
    bl1 = np.zeros((1, _LANES), np.float32)
    bl1[0, :h0] = A("b1")[0]; bl1[0, h0:2 * h0] = A("b4")[0]
    fused["bl1"] = bl1
    wl2 = np.zeros((_LANES, _LANES), np.float32)
    wl2[:h0, :h1] = A("w2"); wl2[h0:2 * h0, h1:2 * h1] = A("w5")
    fused["wl2"] = wl2
    bl2 = np.zeros((1, _LANES), np.float32)
    bl2[0, :h1] = A("b2")[0]; bl2[0, h1:2 * h1] = A("b5")[0]
    fused["bl2"] = bl2
    wl3 = np.zeros((_LANES, _LANES), np.float32)
    wl3[:h1, 0:1] = A("w3"); wl3[h1:2 * h1, 1:2] = A("w6")
    fused["wl3"] = wl3
    bl3 = np.zeros((1, _LANES), np.float32)
    bl3[0, 0] = A("b3")[0, 0]; bl3[0, 1] = A("b6")[0, 0]
    fused["bl3"] = bl3

    # Fused-recurrence exactness invariants (see kernel comment).
    def _lane_mask(off, H):
        m = np.zeros(_LANES, bool)
        for k in range(4):
            m[k * SWp + off:k * SWp + off + H] = True
        return m
    m1, m2 = _lane_mask(0, H1), _lane_mask(H1, H2)
    assert not whh[:H1][:, m2].any() and not whh[H1:][:, m1].any(), \
        "whh cross blocks must be exactly zero"
    assert not wbig1.reshape(wbig1.shape[0], t1 + 1, _LANES)[:, :, m2].any(), \
        "LSTM2 gate lanes in wbig1 must be exactly zero"
    assert not wbig2.reshape(wbig2.shape[0], t2 + 1, _LANES)[:, :, m1].any(), \
        "LSTM1 gate lanes in wbig2 must be exactly zero"

    names = ["whh", "wfcf", "wfcb", "bfc", "wl1s", "wl1u", "bl1",
             "wl2", "bl2", "wl3", "bl3"]
    layout, blocks, r = {}, [], 0
    for n in names:
        a = fused[n]
        nr_pad = _pad8(a.shape[0])                # 8-row (sublane) aligned blocks
        blk = np.zeros((nr_pad, _LANES), np.float32)
        blk[:a.shape[0], :] = a
        blocks.append(blk)
        layout[n] = (r, nr_pad)
        r += nr_pad
    slab = jnp.asarray(np.concatenate(blocks, axis=0))
    dims = dict(t1=t1, t2=t2, o1=o1, o2=o2, h1_dim=H1, h2_dim=H2, adim=adim)
    return {"slab": slab, "wbig1": jnp.asarray(wbig1), "wbig2": jnp.asarray(wbig2),
            "layout": layout, "dims": dims}


# ----------------------------------------------------------------------------
# Wrapper (entire forward jitted: pads + pallas_call + output split fuse)
# ----------------------------------------------------------------------------
def build_critic_double(packed):
    """Returns a jitted forward: (s1, s2, u) -> (q1, q2)."""
    d = packed["dims"]
    layout = packed["layout"]
    slab, wb1, wb2 = packed["slab"], packed["wbig1"], packed["wbig2"]
    t1, t2, o1, o2 = d["t1"], d["t2"], d["o1"], d["o2"]
    adim_p = _pad8(d["adim"])
    w1p, w2p = wb1.shape[0], wb2.shape[0]

    kernel = functools.partial(_critic_double_kernel, layout=layout,
                               t1=t1, t2=t2, h1_dim=d["h1_dim"], h2_dim=d["h2_dim"])

    def _prep_seq(x, Bp, wp):
        bsz, w = x.shape
        x = jnp.concatenate([x, jnp.ones((bsz, 1), x.dtype),
                             jnp.zeros((bsz, wp - w - 1), x.dtype)], axis=1)
        return jnp.pad(x, ((0, Bp - bsz), (0, 0)))

    @jax.jit
    def fwd(s1, s2, u):
        assert s1.shape[1] == t1 * o1 and s2.shape[1] == t2 * o2
        B = s1.shape[0]
        # Batch tile: single tile for small B; 128-row tiles once the batch is
        # large (grid-parallel over TensorCores on v7x, double-buffered DMA).
        bt = _round_up(max(B, 8), 8) if B <= 128 else 128
        Bp = _round_up(B, bt)
        s1p = _prep_seq(s1, Bp, w1p)
        s2p = _prep_seq(s2, Bp, w2p)
        up = jnp.pad(u, ((0, Bp - B), (0, adim_p - u.shape[1])))

        out = pl.pallas_call(
            kernel,
            out_shape=jax.ShapeDtypeStruct((Bp, _LANES), jnp.float32),
            grid=(Bp // bt,),
            in_specs=[
                pl.BlockSpec((bt, w1p), lambda b: (b, 0)),
                pl.BlockSpec((bt, w2p), lambda b: (b, 0)),
                pl.BlockSpec((bt, adim_p), lambda b: (b, 0)),
                pl.BlockSpec(wb1.shape, lambda b: (0, 0)),   # weights: DMA'd once
                pl.BlockSpec(wb2.shape, lambda b: (0, 0)),
                pl.BlockSpec(slab.shape, lambda b: (0, 0)),
            ],
            out_specs=pl.BlockSpec((bt, _LANES), lambda b: (b, 0)),
            compiler_params=pltpu.CompilerParams(dimension_semantics=("parallel",)),
        )(s1p, s2p, up, wb1, wb2, slab)
        return out[:B, 0:1], out[:B, 1:2]

    return fwd


# ----------------------------------------------------------------------------
# Logical (unfused) parameters + pure-JAX reference (validates the fusion math)
# ----------------------------------------------------------------------------
def init_params(key, o1_dim, s1_dim, o2_dim, s2_dim, joint_action_dim, hidden_dim):
    """Deterministic synthetic parameters, per-matrix, kernel layout (in, out)."""
    h0, h1 = hidden_dim
    H1, H2 = s1_dim, s2_dim
    keys = iter(jax.random.split(key, 64))

    def w(shape):
        return (0.1 * jax.random.normal(next(keys), shape)).astype(jnp.float32)

    p = {}
    # LSTM 1: forward recurrence + single backward step + fc split into halves.
    # Gate order [i f g o]; biases are the PyTorch ih+hh biases pre-summed.
    p["wih_f1"], p["whh_f1"], p["b_f1"] = w((o1_dim, 4 * H1)), w((H1, 4 * H1)), w((1, 4 * H1))
    p["wih_b1"], p["b_b1"] = w((o1_dim, 4 * H1)), w((1, 4 * H1))
    p["wfc_f1"], p["wfc_b1"], p["b_fc1"] = w((H1, s1_dim)), w((H1, s1_dim)), w((1, s1_dim))
    # LSTM 2
    p["wih_f2"], p["whh_f2"], p["b_f2"] = w((o2_dim, 4 * H2)), w((H2, 4 * H2)), w((1, 4 * H2))
    p["wih_b2"], p["b_b2"] = w((o2_dim, 4 * H2)), w((1, 4 * H2))
    p["wfc_f2"], p["wfc_b2"], p["b_fc2"] = w((H2, s2_dim)), w((H2, s2_dim)), w((1, s2_dim))
    # Twin critic heads; l1/l4 weights pre-split along the concat axis.
    p["w1s1"], p["w1s2"], p["w1u"] = w((s1_dim, h0)), w((s2_dim, h0)), w((joint_action_dim, h0))
    p["b1"], p["w2"], p["b2"] = w((1, h0)), w((h0, h1)), w((1, h1))
    p["w3"], p["b3"] = w((h1, 1)), w((1, 1))
    p["w4s1"], p["w4s2"], p["w4u"] = w((s1_dim, h0)), w((s2_dim, h0)), w((joint_action_dim, h0))
    p["b4"], p["w5"], p["b5"] = w((1, h0)), w((h0, h1)), w((1, h1))
    p["w6"], p["b6"] = w((h1, 1)), w((1, 1))
    return p


def _lstm_ref(x, wih_f, whh_f, bf, wih_b, bb, wfcf, wfcb, bfc, H):
    """Unfused bi-LSTM + fc on (B, T, obs), returning fc(r_out[:, -1, :])."""
    B, T = x.shape[0], x.shape[1]
    h = jnp.zeros((B, H), jnp.float32)
    c = jnp.zeros((B, H), jnp.float32)
    for t in range(T):
        g = x[:, t, :] @ wih_f + h @ whh_f + bf
        i = jax.nn.sigmoid(g[:, 0:H])
        f = jax.nn.sigmoid(g[:, H:2 * H])
        gg = jnp.tanh(g[:, 2 * H:3 * H])
        o = jax.nn.sigmoid(g[:, 3 * H:4 * H])
        c = f * c + i * gg
        h = o * jnp.tanh(c)
    # Backward direction output at the last timestep (zero initial state).
    gb = x[:, T - 1, :] @ wih_b + bb
    hb = jax.nn.sigmoid(gb[:, 3 * H:4 * H]) * jnp.tanh(
        jax.nn.sigmoid(gb[:, 0:H]) * jnp.tanh(gb[:, 2 * H:3 * H]))
    return h @ wfcf + hb @ wfcb + bfc


def reference_forward(params, s1, s2, u, *, t1, o1_dim, t2, o2_dim):
    """Pure-JAX reference using the unfused per-matrix parameters."""
    p = params
    B = s1.shape[0]
    x1 = s1.reshape(B, t1, o1_dim)
    x2 = s2.reshape(B, t2, o2_dim)
    s1o = _lstm_ref(x1, p["wih_f1"], p["whh_f1"], p["b_f1"], p["wih_b1"], p["b_b1"],
                    p["wfc_f1"], p["wfc_b1"], p["b_fc1"], p["whh_f1"].shape[0])
    s2o = _lstm_ref(x2, p["wih_f2"], p["whh_f2"], p["b_f2"], p["wih_b2"], p["b_b2"],
                    p["wfc_f2"], p["wfc_b2"], p["b_fc2"], p["whh_f2"].shape[0])

    def head(ws1, ws2, wu, b_in, wa, ba, wb, b_out):
        z = jnp.maximum(s1o @ ws1 + s2o @ ws2 + u @ wu + b_in, 0.0)
        z = jnp.maximum(z @ wa + ba, 0.0)
        return z @ wb + b_out

    q1 = head(p["w1s1"], p["w1s2"], p["w1u"], p["b1"], p["w2"], p["b2"], p["w3"], p["b3"])
    q2 = head(p["w4s1"], p["w4s2"], p["w4u"], p["b4"], p["w5"], p["b5"], p["w6"], p["b6"])
    return q1, q2


if __name__ == "__main__":
    # Config: both t1 > 1 and t2 > 1 so both LSTM encoders are exercised.
    B = 4
    o1_dim, s1_dim, t1 = 6, 8, 5
    o2_dim, s2_dim, t2 = 5, 8, 4
    joint_action_dim = 4
    hidden_dim = (32, 32)

    key = jax.random.PRNGKey(0)
    kp, k1, k2, k3 = jax.random.split(key, 4)
    params = init_params(kp, o1_dim, s1_dim, o2_dim, s2_dim, joint_action_dim, hidden_dim)
    packed = pack_params(params, t1=t1, t2=t2)
    fwd = build_critic_double(packed)

    s1 = jax.random.normal(k1, (B, t1 * o1_dim), dtype=jnp.float32)
    s2 = jax.random.normal(k2, (B, t2 * o2_dim), dtype=jnp.float32)
    u = jax.random.normal(k3, (B, joint_action_dim), dtype=jnp.float32)

    q1, q2 = fwd(s1, s2, u)
    q1 = jax.block_until_ready(q1)
    q2 = jax.block_until_ready(q2)

    r1, r2 = reference_forward(params, s1, s2, u,
                               t1=t1, o1_dim=o1_dim, t2=t2, o2_dim=o2_dim)
    np.testing.assert_allclose(np.asarray(q1), np.asarray(r1), rtol=1e-3, atol=1e-4)
    np.testing.assert_allclose(np.asarray(q2), np.asarray(r2), rtol=1e-3, atol=1e-4)

    print("KERNEL_OK")
</pallas_src>

<mosaic_0001>
module attributes {stable_mosaic.version = 11 : i64} {
  func.func @_critic_double_kernel(%arg0: i32, %arg1: memref<8x32xf32, #tpu.memory_space<vmem>>, %arg2: memref<8x24xf32, #tpu.memory_space<vmem>>, %arg3: memref<8x8xf32, #tpu.memory_space<vmem>>, %arg4: memref<32x768xf32, #tpu.memory_space<vmem>>, %arg5: memref<24x640xf32, #tpu.memory_space<vmem>>, %arg6: memref<472x128xf32, #tpu.memory_space<vmem>>, %arg7: memref<8x128xf32, #tpu.memory_space<vmem>>) attributes {dimension_semantics = [#tpu.dimension_semantics<parallel>], iteration_bounds = array<i64: 1>, scalar_prefetch = 0 : i64, scratch_operands = 0 : i64, tpu.core_type = #tpu.core_type<tc>, window_params = [{transform_indices = @transform_0, window_bounds = array<i64: 8, 32>}, {transform_indices = @transform_1, window_bounds = array<i64: 8, 24>}, {transform_indices = @transform_2, window_bounds = array<i64: 8, 8>}, {pipeline_mode = #tpu.pipeline_mode<synchronous>, transform_indices = @transform_3, window_bounds = array<i64: 32, 768>}, {pipeline_mode = #tpu.pipeline_mode<synchronous>, transform_indices = @transform_4, window_bounds = array<i64: 24, 640>}, {pipeline_mode = #tpu.pipeline_mode<synchronous>, transform_indices = @transform_5, window_bounds = array<i64: 472, 128>}, {transform_indices = @transform_6, window_bounds = array<i64: 8, 128>}]} {
    %c0 = arith.constant 0 : index
    %c0_0 = arith.constant 0 : index
    %0 = vector.load %arg1[%c0, %c0_0] : memref<8x32xf32, #tpu.memory_space<vmem>>, vector<8x32xf32>
    %c0_1 = arith.constant 0 : index
    %c0_2 = arith.constant 0 : index
    %1 = vector.load %arg2[%c0_1, %c0_2] : memref<8x24xf32, #tpu.memory_space<vmem>>, vector<8x24xf32>
    %c0_3 = arith.constant 0 : index
    %c0_4 = arith.constant 0 : index
    %2 = vector.load %arg3[%c0_3, %c0_4] : memref<8x8xf32, #tpu.memory_space<vmem>>, vector<8x8xf32>
    %c0_5 = arith.constant 0 : index
    %c0_6 = arith.constant 0 : index
    %3 = vector.load %arg4[%c0_5, %c0_6] : memref<32x768xf32, #tpu.memory_space<vmem>>, vector<32x768xf32>
    %cst = arith.constant dense<0.000000e+00> : vector<8x768xf32>
    %4 = tpu.matmul %0, %3, %cst {dimension_numbers = #tpu.dot_dimension_numbers<[1], [0], [0], [1], [0, 0, 1, 1], [], []>} : vector<8x32xf32>, vector<32x768xf32>, vector<8x768xf32> -> vector<8x768xf32>
    %c0_7 = arith.constant 0 : index
    %c0_8 = arith.constant 0 : index
    %5 = vector.load %arg5[%c0_7, %c0_8] : memref<24x640xf32, #tpu.memory_space<vmem>>, vector<24x640xf32>
    %cst_9 = arith.constant dense<0.000000e+00> : vector<8x640xf32>
    %6 = tpu.matmul %1, %5, %cst_9 {dimension_numbers = #tpu.dot_dimension_numbers<[1], [0], [0], [1], [0, 0, 1, 1], [], []>} : vector<8x24xf32>, vector<24x640xf32>, vector<8x640xf32> -> vector<8x640xf32>
    %c0_10 = arith.constant 0 : index
    %c0_11 = arith.constant 0 : index
    %7 = vector.load %arg6[%c0_10, %c0_11] : memref<472x128xf32, #tpu.memory_space<vmem>>, vector<16x128xf32>
    %cst_12 = arith.constant 0.000000e+00 : f32
    %8 = vector.broadcast %cst_12 : f32 to vector<8x16xf32>
    %cst_13 = arith.constant 0.000000e+00 : f32
    %9 = vector.broadcast %cst_13 : f32 to vector<8x16xf32>
    %10 = vector.extract_strided_slice %4 {offsets = [0, 0], sizes = [8, 128], strides = [1, 1]} : vector<8x768xf32> to vector<8x128xf32>
    %cst_14 = arith.constant dense<0.000000e+00> : vector<8x128xf32>
    %11 = tpu.matmul %8, %7, %cst_14 {dimension_numbers = #tpu.dot_dimension_numbers<[1], [0], [0], [1], [0, 0, 1, 1], [], []>} : vector<8x16xf32>, vector<16x128xf32>, vector<8x128xf32> -> vector<8x128xf32>
    %12 = arith.addf %10, %11 : vector<8x128xf32>
    %13 = arith.negf %12 : vector<8x128xf32>
    %14 = math.exp %13 : vector<8x128xf32>
    %cst_15 = arith.constant 1.000000e+00 : f32
    %15 = vector.broadcast %cst_15 : f32 to vector<8x128xf32>
    %16 = arith.addf %15, %14 : vector<8x128xf32>
    %17 = arith.divf %15, %16 : vector<8x128xf32>
    %18 = math.tanh %12 : vector<8x128xf32>
    %19 = vector.extract_strided_slice %17 {offsets = [0, 16], sizes = [8, 16], strides = [1, 1]} : vector<8x128xf32> to vector<8x16xf32>
    %20 = arith.mulf %19, %9 : vector<8x16xf32>
    %21 = vector.extract_strided_slice %17 {offsets = [0, 0], sizes = [8, 16], strides = [1, 1]} : vector<8x128xf32> to vector<8x16xf32>
    %22 = vector.extract_strided_slice %18 {offsets = [0, 32], sizes = [8, 16], strides = [1, 1]} : vector<8x128xf32> to vector<8x16xf32>
    %23 = arith.mulf %21, %22 : vector<8x16xf32>
    %24 = arith.addf %20, %23 : vector<8x16xf32>
    %25 = vector.extract_strided_slice %17 {offsets = [0, 48], sizes = [8, 16], strides = [1, 1]} : vector<8x128xf32> to vector<8x16xf32>
    %26 = math.tanh %24 : vector<8x16xf32>
    %27 = arith.mulf %25, %26 : vector<8x16xf32>
    %28 = vector.extract_strided_slice %4 {offsets = [0, 128], sizes = [8, 128], strides = [1, 1]} : vector<8x768xf32> to vector<8x128xf32>
    %29 = vector.extract_strided_slice %6 {offsets = [0, 0], sizes = [8, 128], strides = [1, 1]} : vector<8x640xf32> to vector<8x128xf32>
    %30 = arith.addf %28, %29 : vector<8x128xf32>
    %cst_16 = arith.constant dense<0.000000e+00> : vector<8x128xf32>
    %31 = tpu.matmul %27, %7, %cst_16 {dimension_numbers = #tpu.dot_dimension_numbers<[1], [0], [0], [1], [0, 0, 1, 1], [], []>} : vector<8x16xf32>, vector<16x128xf32>, vector<8x128xf32> -> vector<8x128xf32>
    %32 = arith.addf %30, %31 : vector<8x128xf32>
    %33 = arith.negf %32 : vector<8x128xf32>
    %34 = math.exp %33 : vector<8x128xf32>
    %cst_17 = arith.constant 1.000000e+00 : f32
    %35 = vector.broadcast %cst_17 : f32 to vector<8x128xf32>
    %36 = arith.addf %35, %34 : vector<8x128xf32>
    %37 = arith.divf %35, %36 : vector<8x128xf32>
    %38 = math.tanh %32 : vector<8x128xf32>
    %39 = vector.extract_strided_slice %37 {offsets = [0, 16], sizes = [8, 16], strides = [1, 1]} : vector<8x128xf32> to vector<8x16xf32>
    %40 = arith.mulf %39, %24 : vector<8x16xf32>
    %41 = vector.extract_strided_slice %37 {offsets = [0, 0], sizes = [8, 16], strides = [1, 1]} : vector<8x128xf32> to vector<8x16xf32>
    %42 = vector.extract_strided_slice %38 {offsets = [0, 32], sizes = [8, 16], strides = [1, 1]} : vector<8x128xf32> to vector<8x16xf32>
    %43 = arith.mulf %41, %42 : vector<8x16xf32>
    %44 = arith.addf %40, %43 : vector<8x16xf32>
    %45 = vector.extract_strided_slice %37 {offsets = [0, 48], sizes = [8, 16], strides = [1, 1]} : vector<8x128xf32> to vector<8x16xf32>
    %46 = math.tanh %44 : vector<8x16xf32>
    %47 = arith.mulf %45, %46 : vector<8x16xf32>
    %48 = vector.extract_strided_slice %4 {offsets = [0, 256], sizes = [8, 128], strides = [1, 1]} : vector<8x768xf32> to vector<8x128xf32>
    %49 = vector.extract_strided_slice %6 {offsets = [0, 128], sizes = [8, 128], strides = [1, 1]} : vector<8x640xf32> to vector<8x128xf32>
    %50 = arith.addf %48, %49 : vector<8x128xf32>
    %cst_18 = arith.constant dense<0.000000e+00> : vector<8x128xf32>
    %51 = tpu.matmul %47, %7, %cst_18 {dimension_numbers = #tpu.dot_dimension_numbers<[1], [0], [0], [1], [0, 0, 1, 1], [], []>} : vector<8x16xf32>, vector<16x128xf32>, vector<8x128xf32> -> vector<8x128xf32>
    %52 = arith.addf %50, %51 : vector<8x128xf32>
    %53 = arith.negf %52 : vector<8x128xf32>
    %54 = math.exp %53 : vector<8x128xf32>
    %cst_19 = arith.constant 1.000000e+00 : f32
    %55 = vector.broadcast %cst_19 : f32 to vector<8x128xf32>
    %56 = arith.addf %55, %54 : vector<8x128xf32>
    %57 = arith.divf %55, %56 : vector<8x128xf32>
    %58 = math.tanh %52 : vector<8x128xf32>
    %59 = vector.extract_strided_slice %57 {offsets = [0, 16], sizes = [8, 16], strides = [1, 1]} : vector<8x128xf32> to vector<8x16xf32>
    %60 = arith.mulf %59, %44 : vector<8x16xf32>
    %61 = vector.extract_strided_slice %57 {offsets = [0, 0], sizes = [8, 16], strides = [1, 1]} : vector<8x128xf32> to vector<8x16xf32>
    %62 = vector.extract_strided_slice %58 {offsets = [0, 32], sizes = [8, 16], strides = [1, 1]} : vector<8x128xf32> to vector<8x16xf32>
    %63 = arith.mulf %61, %62 : vector<8x16xf32>
    %64 = arith.addf %60, %63 : vector<8x16xf32>
    %65 = vector.extract_strided_slice %57 {offsets = [0, 48], sizes = [8, 16], strides = [1, 1]} : vector<8x128xf32> to vector<8x16xf32>
    %66 = math.tanh %64 : vector<8x16xf32>
    %67 = arith.mulf %65, %66 : vector<8x16xf32>
    %68 = vector.extract_strided_slice %4 {offsets = [0, 384], sizes = [8, 128], strides = [1, 1]} : vector<8x768xf32> to vector<8x128xf32>
    %69 = vector.extract_strided_slice %6 {offsets = [0, 256], sizes = [8, 128], strides = [1, 1]} : vector<8x640xf32> to vector<8x128xf32>
    %70 = arith.addf %68, %69 : vector<8x128xf32>
    %cst_20 = arith.constant dense<0.000000e+00> : vector<8x128xf32>
    %71 = tpu.matmul %67, %7, %cst_20 {dimension_numbers = #tpu.dot_dimension_numbers<[1], [0], [0], [1], [0, 0, 1, 1], [], []>} : vector<8x16xf32>, vector<16x128xf32>, vector<8x128xf32> -> vector<8x128xf32>
    %72 = arith.addf %70, %71 : vector<8x128xf32>
    %73 = arith.negf %72 : vector<8x128xf32>
    %74 = math.exp %73 : vector<8x128xf32>
    %cst_21 = arith.constant 1.000000e+00 : f32
    %75 = vector.broadcast %cst_21 : f32 to vector<8x128xf32>
    %76 = arith.addf %75, %74 : vector<8x128xf32>
    %77 = arith.divf %75, %76 : vector<8x128xf32>
    %78 = math.tanh %72 : vector<8x128xf32>
    %79 = vector.extract_strided_slice %77 {offsets = [0, 16], sizes = [8, 16], strides = [1, 1]} : vector<8x128xf32> to vector<8x16xf32>
    %80 = arith.mulf %79, %64 : vector<8x16xf32>
    %81 = vector.extract_strided_slice %77 {offsets = [0, 0], sizes = [8, 16], strides = [1, 1]} : vector<8x128xf32> to vector<8x16xf32>
    %82 = vector.extract_strided_slice %78 {offsets = [0, 32], sizes = [8, 16], strides = [1, 1]} : vector<8x128xf32> to vector<8x16xf32>
    %83 = arith.mulf %81, %82 : vector<8x16xf32>
    %84 = arith.addf %80, %83 : vector<8x16xf32>
    %85 = vector.extract_strided_slice %77 {offsets = [0, 48], sizes = [8, 16], strides = [1, 1]} : vector<8x128xf32> to vector<8x16xf32>
    %86 = math.tanh %84 : vector<8x16xf32>
    %87 = arith.mulf %85, %86 : vector<8x16xf32>
    %88 = vector.extract_strided_slice %4 {offsets = [0, 512], sizes = [8, 128], strides = [1, 1]} : vector<8x768xf32> to vector<8x128xf32>
    %89 = vector.extract_strided_slice %6 {offsets = [0, 384], sizes = [8, 128], strides = [1, 1]} : vector<8x640xf32> to vector<8x128xf32>
    %90 = arith.addf %88, %89 : vector<8x128xf32>
    %cst_22 = arith.constant dense<0.000000e+00> : vector<8x128xf32>
    %91 = tpu.matmul %87, %7, %cst_22 {dimension_numbers = #tpu.dot_dimension_numbers<[1], [0], [0], [1], [0, 0, 1, 1], [], []>} : vector<8x16xf32>, vector<16x128xf32>, vector<8x128xf32> -> vector<8x128xf32>
    %92 = arith.addf %90, %91 : vector<8x128xf32>
    %93 = arith.negf %92 : vector<8x128xf32>
    %94 = math.exp %93 : vector<8x128xf32>
    %cst_23 = arith.constant 1.000000e+00 : f32
    %95 = vector.broadcast %cst_23 : f32 to vector<8x128xf32>
    %96 = arith.addf %95, %94 : vector<8x128xf32>
    %97 = arith.divf %95, %96 : vector<8x128xf32>
    %98 = math.tanh %92 : vector<8x128xf32>
    %99 = vector.extract_strided_slice %97 {offsets = [0, 16], sizes = [8, 16], strides = [1, 1]} : vector<8x128xf32> to vector<8x16xf32>
    %100 = arith.mulf %99, %84 : vector<8x16xf32>
    %101 = vector.extract_strided_slice %97 {offsets = [0, 0], sizes = [8, 16], strides = [1, 1]} : vector<8x128xf32> to vector<8x16xf32>
    %102 = vector.extract_strided_slice %98 {offsets = [0, 32], sizes = [8, 16], strides = [1, 1]} : vector<8x128xf32> to vector<8x16xf32>
    %103 = arith.mulf %101, %102 : vector<8x16xf32>
    %104 = arith.addf %100, %103 : vector<8x16xf32>
    %105 = vector.extract_strided_slice %97 {offsets = [0, 48], sizes = [8, 16], strides = [1, 1]} : vector<8x128xf32> to vector<8x16xf32>
    %106 = math.tanh %104 : vector<8x16xf32>
    %107 = arith.mulf %105, %106 : vector<8x16xf32>
    %108 = vector.extract_strided_slice %4 {offsets = [0, 640], sizes = [8, 128], strides = [1, 1]} : vector<8x768xf32> to vector<8x128xf32>
    %109 = vector.extract_strided_slice %6 {offsets = [0, 512], sizes = [8, 128], strides = [1, 1]} : vector<8x640xf32> to vector<8x128xf32>
    %110 = arith.addf %108, %109 : vector<8x128xf32>
    %111 = arith.negf %110 : vector<8x128xf32>
    %112 = math.exp %111 : vector<8x128xf32>
    %cst_24 = arith.constant 1.000000e+00 : f32
    %113 = vector.broadcast %cst_24 : f32 to vector<8x128xf32>
    %114 = arith.addf %113, %112 : vector<8x128xf32>
    %115 = arith.divf %113, %114 : vector<8x128xf32>
    %116 = math.tanh %110 : vector<8x128xf32>
    %117 = vector.extract_strided_slice %115 {offsets = [0, 48], sizes = [8, 16], strides = [1, 1]} : vector<8x128xf32> to vector<8x16xf32>
    %118 = vector.extract_strided_slice %115 {offsets = [0, 0], sizes = [8, 16], strides = [1, 1]} : vector<8x128xf32> to vector<8x16xf32>
    %119 = vector.extract_strided_slice %116 {offsets = [0, 32], sizes = [8, 16], strides = [1, 1]} : vector<8x128xf32> to vector<8x16xf32>
    %120 = arith.mulf %118, %119 : vector<8x16xf32>
    %121 = math.tanh %120 : vector<8x16xf32>
    %122 = arith.mulf %117, %121 : vector<8x16xf32>
    %c16 = arith.constant 16 : index
    %c0_25 = arith.constant 0 : index
    %123 = vector.load %arg6[%c16, %c0_25] : memref<472x128xf32, #tpu.memory_space<vmem>>, vector<16x128xf32>
    %cst_26 = arith.constant dense<0.000000e+00> : vector<8x128xf32>
    %124 = tpu.matmul %107, %123, %cst_26 {dimension_numbers = #tpu.dot_dimension_numbers<[1], [0], [0], [1], [0, 0, 1, 1], [], []>} : vector<8x16xf32>, vector<16x128xf32>, vector<8x128xf32> -> vector<8x128xf32>
    %c32 = arith.constant 32 : index
    %c0_27 = arith.constant 0 : index
    %125 = vector.load %arg6[%c32, %c0_27] : memref<472x128xf32, #tpu.memory_space<vmem>>, vector<16x128xf32>
    %cst_28 = arith.constant dense<0.000000e+00> : vector<8x128xf32>
    %126 = tpu.matmul %122, %125, %cst_28 {dimension_numbers = #tpu.dot_dimension_numbers<[1], [0], [0], [1], [0, 0, 1, 1], [], []>} : vector<8x16xf32>, vector<16x128xf32>, vector<8x128xf32> -> vector<8x128xf32>
    %127 = arith.addf %124, %126 : vector<8x128xf32>
    %c48 = arith.constant 48 : index
    %c0_29 = arith.constant 0 : index
    %128 = vector.load %arg6[%c48, %c0_29] : memref<472x128xf32, #tpu.memory_space<vmem>>, vector<8x128xf32>
    %129 = vector.extract_strided_slice %128 {offsets = [0, 0], sizes = [1, 128], strides = [1, 1]} : vector<8x128xf32> to vector<1x128xf32>
    %130 = vector.broadcast %129 : vector<1x128xf32> to vector<8x128xf32>
    %131 = arith.addf %127, %130 : vector<8x128xf32>
    %c56 = arith.constant 56 : index
    %c0_30 = arith.constant 0 : index
    %132 = vector.load %arg6[%c56, %c0_30] : memref<472x128xf32, #tpu.memory_space<vmem>>, vector<128x128xf32>
    %cst_31 = arith.constant dense<0.000000e+00> : vector<8x128xf32>
    %133 = tpu.matmul %131, %132, %cst_31 {dimension_numbers = #tpu.dot_dimension_numbers<[1], [0], [0], [1], [0, 0, 1, 1], [], []>} : vector<8x128xf32>, vector<128x128xf32>, vector<8x128xf32> -> vector<8x128xf32>
    %c184 = arith.constant 184 : index
    %c0_32 = arith.constant 0 : index
    %134 = vector.load %arg6[%c184, %c0_32] : memref<472x128xf32, #tpu.memory_space<vmem>>, vector<8x128xf32>
    %cst_33 = arith.constant dense<0.000000e+00> : vector<8x128xf32>
    %135 = tpu.matmul %2, %134, %cst_33 {dimension_numbers = #tpu.dot_dimension_numbers<[1], [0], [0], [1], [0, 0, 1, 1], [], []>} : vector<8x8xf32>, vector<8x128xf32>, vector<8x128xf32> -> vector<8x128xf32>
    %136 = arith.addf %133, %135 : vector<8x128xf32>
    %c192 = arith.constant 192 : index
    %c0_34 = arith.constant 0 : index
    %137 = vector.load %arg6[%c192, %c0_34] : memref<472x128xf32, #tpu.memory_space<vmem>>, vector<8x128xf32>
    %138 = vector.extract_strided_slice %137 {offsets = [0, 0], sizes = [1, 128], strides = [1, 1]} : vector<8x128xf32> to vector<1x128xf32>
    %139 = vector.broadcast %138 : vector<1x128xf32> to vector<8x128xf32>
    %140 = arith.addf %136, %139 : vector<8x128xf32>
    %cst_35 = arith.constant 0.000000e+00 : f32
    %141 = vector.broadcast %cst_35 : f32 to vector<8x128xf32>
    %142 = arith.maximumf %140, %141 : vector<8x128xf32>
    %c200 = arith.constant 200 : index
    %c0_36 = arith.constant 0 : index
    %143 = vector.load %arg6[%c200, %c0_36] : memref<472x128xf32, #tpu.memory_space<vmem>>, vector<128x128xf32>
    %cst_37 = arith.constant dense<0.000000e+00> : vector<8x128xf32>
    %144 = tpu.matmul %142, %143, %cst_37 {dimension_numbers = #tpu.dot_dimension_numbers<[1], [0], [0], [1], [0, 0, 1, 1], [], []>} : vector<8x128xf32>, vector<128x128xf32>, vector<8x128xf32> -> vector<8x128xf32>
    %c328 = arith.constant 328 : index
    %c0_38 = arith.constant 0 : index
    %145 = vector.load %arg6[%c328, %c0_38] : memref<472x128xf32, #tpu.memory_space<vmem>>, vector<8x128xf32>
    %146 = vector.extract_strided_slice %145 {offsets = [0, 0], sizes = [1, 128], strides = [1, 1]} : vector<8x128xf32> to vector<1x128xf32>
    %147 = vector.broadcast %146 : vector<1x128xf32> to vector<8x128xf32>
    %148 = arith.addf %144, %147 : vector<8x128xf32>
    %cst_39 = arith.constant 0.000000e+00 : f32
    %149 = vector.broadcast %cst_39 : f32 to vector<8x128xf32>
    %150 = arith.maximumf %148, %149 : vector<8x128xf32>
    %c336 = arith.constant 336 : index
    %c0_40 = arith.constant 0 : index
    %151 = vector.load %arg6[%c336, %c0_40] : memref<472x128xf32, #tpu.memory_space<vmem>>, vector<128x128xf32>
    %cst_41 = arith.constant dense<0.000000e+00> : vector<8x128xf32>
    %152 = tpu.matmul %150, %151, %cst_41 {dimension_numbers = #tpu.dot_dimension_numbers<[1], [0], [0], [1], [0, 0, 1, 1], [], []>} : vector<8x128xf32>, vector<128x128xf32>, vector<8x128xf32> -> vector<8x128xf32>
    %c464 = arith.constant 464 : index
    %c0_42 = arith.constant 0 : index
    %153 = vector.load %arg6[%c464, %c0_42] : memref<472x128xf32, #tpu.memory_space<vmem>>, vector<8x128xf32>
    %154 = vector.extract_strided_slice %153 {offsets = [0, 0], sizes = [1, 128], strides = [1, 1]} : vector<8x128xf32> to vector<1x128xf32>
    %155 = vector.broadcast %154 : vector<1x128xf32> to vector<8x128xf32>
    %156 = arith.addf %152, %155 : vector<8x128xf32>
    %c0_43 = arith.constant 0 : index
    %c0_44 = arith.constant 0 : index
    %157 = vector.load %arg7[%c0_43, %c0_44] : memref<8x128xf32, #tpu.memory_space<vmem>>, vector<8x128xf32>
    tpu.vector_store %arg7[%c0_43, %c0_44], %156 {strides = array<i32>} : memref<8x128xf32, #tpu.memory_space<vmem>>, vector<8x128xf32>,
    return
  }
  func.func @transform_0(%arg0: i32) -> (i32, i32) {
    %c0_i32 = arith.constant 0 : i32
    %c0_i32_0 = arith.constant 0 : i32
    return %arg0, %c0_i32 : i32, i32
  }
  func.func @transform_1(%arg0: i32) -> (i32, i32) {
    %c0_i32 = arith.constant 0 : i32
    %c0_i32_0 = arith.constant 0 : i32
    return %arg0, %c0_i32 : i32, i32
  }
  func.func @transform_2(%arg0: i32) -> (i32, i32) {
    %c0_i32 = arith.constant 0 : i32
    %c0_i32_0 = arith.constant 0 : i32
    return %arg0, %c0_i32 : i32, i32
  }
  func.func @transform_3(%arg0: i32) -> (i32, i32) {
    %c0_i32 = arith.constant 0 : i32
    %c0_i32_0 = arith.constant 0 : i32
    %c0_i32_1 = arith.constant 0 : i32
    return %c0_i32, %c0_i32_0 : i32, i32
  }
  func.func @transform_4(%arg0: i32) -> (i32, i32) {
    %c0_i32 = arith.constant 0 : i32
    %c0_i32_0 = arith.constant 0 : i32
    %c0_i32_1 = arith.constant 0 : i32
    return %c0_i32, %c0_i32_0 : i32, i32
  }
  func.func @transform_5(%arg0: i32) -> (i32, i32) {
    %c0_i32 = arith.constant 0 : i32
    %c0_i32_0 = arith.constant 0 : i32
    %c0_i32_1 = arith.constant 0 : i32
    return %c0_i32, %c0_i32_0 : i32, i32
  }
  func.func @transform_6(%arg0: i32) -> (i32, i32) {
    %c0_i32 = arith.constant 0 : i32
    %c0_i32_0 = arith.constant 0 : i32
    return %arg0, %c0_i32 : i32, i32
  }
}

</mosaic_0001>

<llo_original>
// kernel: fwd.1
$region0: #{fwd.1}
  #allocation0 [shape = 'u32[]', space=smem, size = 0x4, offset = 0x4, fixed_abs, tag = 'smem constant byte address 0x4 - core index']
  #allocation1 [shape = 'u32[72,128]{1,0:T(1,128)}', space=vmem, size = 0x9000, scoped, tag = 'internal scratch']
  %s0 = inlined_call_operand.vmem [shape: f32[8,32], index: 0, kind: input, shape index: {}]
  %s1 = inlined_call_operand.vmem [shape: f32[8,24], index: 1, kind: input, shape index: {}]
  %s2 = inlined_call_operand.vmem [shape: f32[8,8], index: 2, kind: input, shape index: {}]
  %s3 = inlined_call_operand.hbm [shape: f32[32,768], index: 3, kind: input, shape index: {}]
  %s4 = inlined_call_operand.hbm [shape: f32[24,640], index: 4, kind: input, shape index: {}]
  %s5 = inlined_call_operand.hbm [shape: f32[472,128], index: 5, kind: input, shape index: {}]
  %s6 = inlined_call_operand.vmem [shape: f32[8,128], index: 6, kind: output, shape index: {}]
  %s7 = sld [smem:[#allocation0]]
  $region46: #{fwd.1} parent=0
    _
  %s9 = ssub.s32 1, %s7
  %s10 = scalar_select 0, %s9, %s7
  $region1: #{fwd.1} parent=0
    #allocation2 [shape = 'u8[98304]{0}', space=vmem, size = 0x18000, scoped, tag = 'input window, operand 3, single buffered']
    #allocation3 [shape = 's32[1]{0}', space=sflag, size = 0x4, scoped, tag = 'scoped memory for fwd.1']
    #allocation4 [shape = 'u8[61440]{0}', space=vmem, size = 0xf000, scoped, tag = 'input window, operand 4, single buffered']
    #allocation5 [shape = 's32[1]{0}', space=sflag, size = 0x4, scoped, tag = 'scoped memory for fwd.1']
    #allocation6 [shape = 'u8[241664]{0}', space=vmem, size = 0x3b000, scoped, tag = 'input window, operand 5, single buffered']
    %11 = vsyncpa [#allocation3], 0
    %12 = vsyncpa [#allocation5], 0
    // Predicated region
    $region2: #{fwd.1} parent=1 // pred_check
      _
    $region3: #{fwd.1} parent=1 // pred_check_branch
      %14 = sbr.rel (0) target = $region5
    $region4: #{fwd.1} parent=1 // pred_region
      _
    $region5: #{fwd.1} parent=1 // pred_fallthru
      _
    // Predicated region
    $region6: #{fwd.1} parent=1 // pred_check
      _
    $region7: #{fwd.1} parent=1 // pred_check_branch
      %16 = sbr.rel (0) target = $region9
    $region8: #{fwd.1} parent=1 // pred_region
      _
    $region9: #{fwd.1} parent=1 // pred_fallthru
      _
    // Predicated region
    $region10: #{fwd.1} parent=1 // pred_check
      _
    $region11: #{fwd.1} parent=1 // pred_check_branch
      %18 = sbr.rel (0) target = $region13
    $region12: #{fwd.1} parent=1 // pred_region
      _
    $region13: #{fwd.1} parent=1 // pred_fallthru
      _
    // Predicated region
    $region14: #{fwd.1} parent=1 // pred_check
      _
    $region15: #{fwd.1} parent=1 // pred_check_branch
      %20 = sbr.rel (0) target = $region17
    $region16: #{fwd.1} parent=1 // pred_region
      %22 = vsyncadd [#allocation3], 0
      %s23 = sshll.u32 %s3, 4
      %s24 = int_to_ptr.hbm [resolvable:$true] %s23
      %s25 = sshll.u32 [#allocation2], 4
      %s26 = int_to_ptr.vmem [resolvable:$true] %s25
      %31 = dma.hbm_to_vmem [thread:$0]  %s24, 3072, %s26, [#allocation3], 768, 768, 48
    $region17: #{fwd.1} parent=1 // pred_fallthru
      _
    // Predicated region
    $region18: #{fwd.1} parent=1 // pred_check
      _
    $region19: #{fwd.1} parent=1 // pred_check_branch
      %33 = sbr.rel (0) target = $region21
    $region20: #{fwd.1} parent=1 // pred_region
      %35 = vsyncadd [#allocation5], 0
      %s36 = sshll.u32 %s4, 4
      %s37 = int_to_ptr.hbm [resolvable:$true] %s36
      %s38 = sshll.u32 [#allocation4], 4
      %s39 = int_to_ptr.vmem [resolvable:$true] %s38
      %44 = dma.hbm_to_vmem [thread:$0]  %s37, 1920, %s39, [#allocation5], 640, 640, 40
    $region21: #{fwd.1} parent=1 // pred_fallthru
      _
    // Predicated region
    $region22: #{fwd.1} parent=1 // pred_check
      _
    $region23: #{fwd.1} parent=1 // pred_check_branch
      %46 = sbr.rel (0) target = $region25
    $region24: #{fwd.1} parent=1 // pred_region
      %48 = vsyncadd [#allocation5], 0
      %s49 = sshll.u32 %s5, 4
      %s50 = int_to_ptr.hbm [resolvable:$true] %s49
      %s51 = sshll.u32 [#allocation6], 4
      %s52 = int_to_ptr.vmem [resolvable:$true] %s51
      %57 = dma.hbm_to_vmem [thread:$0]  %s50, 7552, %s52, [#allocation5], 128, 128, 8
    $region25: #{fwd.1} parent=1 // pred_fallthru
      _
    // Predicated region
    $region26: #{fwd.1} parent=1 // pred_check
      _
    $region27: #{fwd.1} parent=1 // pred_check_branch
      %59 = sbr.rel (0) target = $region29
    $region28: #{fwd.1} parent=1 // pred_region
      %61 = dma.done [#allocation3], 3072
    $region29: #{fwd.1} parent=1 // pred_fallthru
      _
    // Predicated region
    $region30: #{fwd.1} parent=1 // pred_check
      _
    $region31: #{fwd.1} parent=1 // pred_check_branch
      %63 = sbr.rel (0) target = $region33
    $region32: #{fwd.1} parent=1 // pred_region
      %65 = dma.done [#allocation5], 1920
    $region33: #{fwd.1} parent=1 // pred_fallthru
      _
    // Predicated region
    $region34: #{fwd.1} parent=1 // pred_check
      _
    $region35: #{fwd.1} parent=1 // pred_check_branch
      %67 = sbr.rel (0) target = $region37
    $region36: #{fwd.1} parent=1 // pred_region
      %69 = dma.done [#allocation5], 7552
    $region37: #{fwd.1} parent=1 // pred_fallthru
      _
    %v70 = vld [vmem:[%s0] sm:$0xff]
    %v71 = vld [vmem:[%s1] sm:$0xff]
    %v72 = vld [vmem:[%s2] sm:$0xff]
    %v73 = vld [vmem:[#allocation2] sm:$0xff]
    %v74 = vld [vmem:[#allocation2 + $0x8] sm:$0xff]
    %v75 = vld [vmem:[#allocation2 + $0x10] sm:$0xff]
    %v76 = vld [vmem:[#allocation2 + $0x18] sm:$0xff]
    %v77 = vld [vmem:[#allocation2 + $0x20] sm:$0xff]
    %v78 = vld [vmem:[#allocation2 + $0x28] sm:$0xff]
    %v79 = vld [vmem:[#allocation2 + $0x30] sm:$0xff]
    %v80 = vld [vmem:[#allocation2 + $0x38] sm:$0xff]
    %v81 = vld [vmem:[#allocation2 + $0x40] sm:$0xff]
    %v82 = vld [vmem:[#allocation2 + $0x48] sm:$0xff]
    %v83 = vld [vmem:[#allocation2 + $0x50] sm:$0xff]
    %v84 = vld [vmem:[#allocation2 + $0x58] sm:$0xff]
    %v85 = vld [vmem:[#allocation2 + $0x60] sm:$0xff]
    %v86 = vld [vmem:[#allocation2 + $0x68] sm:$0xff]
    %v87 = vld [vmem:[#allocation2 + $0x70] sm:$0xff]
    %v88 = vld [vmem:[#allocation2 + $0x78] sm:$0xff]
    %v89 = vld [vmem:[#allocation2 + $0x80] sm:$0xff]
    %v90 = vld [vmem:[#allocation2 + $0x88] sm:$0xff]
    %v91 = vld [vmem:[#allocation2 + $0x90] sm:$0xff]
    %v92 = vld [vmem:[#allocation2 + $0x98] sm:$0xff]
    %v93 = vld [vmem:[#allocation2 + $0xa0] sm:$0xff]
    %v94 = vld [vmem:[#allocation2 + $0xa8] sm:$0xff]
    %v95 = vld [vmem:[#allocation2 + $0xb0] sm:$0xff]
    %v96 = vld [vmem:[#allocation2 + $0xb8] sm:$0xff]
    %vm97 = vcmask 261120
    %v99 = vsel %vm97, %v70, 0
    %101 = vmatpush.msra.mxu0 0.0
    %102 = vmatpush.msra.mxu0 0.0
    %103 = vmatpush.msra.mxu0 0.0
    %104 = vmatpush.msra.mxu0 0.0
    %105 = vmatpush.msra.mxu0 0.0
    %106 = vmatpush.msra.mxu0 0.0
    %107 = vmatpush.msra.mxu0 0.0
    %108 = vmatpush.msra.mxu0 0.0
    %109 = vmatpush.msra.mxu0 0.0
    %110 = vmatpush.msra.mxu0 0.0
    %111 = vmatpush.msra.mxu0 0.0
    %112 = vmatpush.msra.mxu0 0.0
    %113 = vmatpush.msra.mxu0 %v91
    %114 = vmatpush.msra.mxu0 %v85
    %115 = vmatpush.msra.mxu0 %v79
    %116 = vmatpush.msra.mxu0 %v73
    %117 = vmatmul.f32.gmra.mxu0 %v99
    %v118 = vpop.f32.mrf.mxu0
    %v119 = vadd.f32 0.0, %v118
    %120 = vdwg.mxu0
    %121 = vmatpush.msra.mxu0 0.0
    %122 = vmatpush.msra.mxu0 0.0
    %123 = vmatpush.msra.mxu0 0.0
    %124 = vmatpush.msra.mxu0 0.0
    %125 = vmatpush.msra.mxu0 0.0
    %126 = vmatpush.msra.mxu0 0.0
    %127 = vmatpush.msra.mxu0 0.0
    %128 = vmatpush.msra.mxu0 0.0
    %129 = vmatpush.msra.mxu0 0.0
    %130 = vmatpush.msra.mxu0 0.0
    %131 = vmatpush.msra.mxu0 0.0
    %132 = vmatpush.msra.mxu0 0.0
    %133 = vmatpush.msra.mxu0 %v92
    %134 = vmatpush.msra.mxu0 %v86
    %135 = vmatpush.msra.mxu0 %v80
    %136 = vmatpush.msra.mxu0 %v74
    %137 = vmatmul.f32.gmra.mxu0 %v99
    %v138 = vpop.f32.mrf.mxu0
    %v139 = vadd.f32 0.0, %v138
    %140 = vdwg.mxu0
    %141 = vmatpush.msra.mxu0 0.0
    %142 = vmatpush.msra.mxu0 0.0
    %143 = vmatpush.msra.mxu0 0.0
    %144 = vmatpush.msra.mxu0 0.0
    %145 = vmatpush.msra.mxu0 0.0
    %146 = vmatpush.msra.mxu0 0.0
    %147 = vmatpush.msra.mxu0 0.0
    %148 = vmatpush.msra.mxu0 0.0
    %149 = vmatpush.msra.mxu0 0.0
    %150 = vmatpush.msra.mxu0 0.0
    %151 = vmatpush.msra.mxu0 0.0
    %152 = vmatpush.msra.mxu0 0.0
    %153 = vmatpush.msra.mxu0 %v93
    %154 = vmatpush.msra.mxu0 %v87
    %155 = vmatpush.msra.mxu0 %v81
    %156 = vmatpush.msra.mxu0 %v75
    %157 = vmatmul.f32.gmra.mxu0 %v99
    %v158 = vpop.f32.mrf.mxu0
    %v159 = vadd.f32 0.0, %v158
    %160 = vdwg.mxu0
    %161 = vmatpush.msra.mxu0 0.0
    %162 = vmatpush.msra.mxu0 0.0
    %163 = vmatpush.msra.mxu0 0.0
    %164 = vmatpush.msra.mxu0 0.0
    %165 = vmatpush.msra.mxu0 0.0
    %166 = vmatpush.msra.mxu0 0.0
    %167 = vmatpush.msra.mxu0 0.0
    %168 = vmatpush.msra.mxu0 0.0
    %169 = vmatpush.msra.mxu0 0.0
    %170 = vmatpush.msra.mxu0 0.0
    %171 = vmatpush.msra.mxu0 0.0
    %172 = vmatpush.msra.mxu0 0.0
    %173 = vmatpush.msra.mxu0 %v94
    %174 = vmatpush.msra.mxu0 %v88
    %175 = vmatpush.msra.mxu0 %v82
    %176 = vmatpush.msra.mxu0 %v76
    %177 = vmatmul.f32.gmra.mxu0 %v99
    %v178 = vpop.f32.mrf.mxu0
    %v179 = vadd.f32 0.0, %v178
    %180 = vdwg.mxu0
    %181 = vmatpush.msra.mxu0 0.0
    %182 = vmatpush.msra.mxu0 0.0
    %183 = vmatpush.msra.mxu0 0.0
    %184 = vmatpush.msra.mxu0 0.0
    %185 = vmatpush.msra.mxu0 0.0
    %186 = vmatpush.msra.mxu0 0.0
    %187 = vmatpush.msra.mxu0 0.0
    %188 = vmatpush.msra.mxu0 0.0
    %189 = vmatpush.msra.mxu0 0.0
    %190 = vmatpush.msra.mxu0 0.0
    %191 = vmatpush.msra.mxu0 0.0
    %192 = vmatpush.msra.mxu0 0.0
    %193 = vmatpush.msra.mxu0 %v95
    %194 = vmatpush.msra.mxu0 %v89
    %195 = vmatpush.msra.mxu0 %v83
    %196 = vmatpush.msra.mxu0 %v77
    %197 = vmatmul.f32.gmra.mxu0 %v99
    %v198 = vpop.f32.mrf.mxu0
    %v199 = vadd.f32 0.0, %v198
    %200 = vdwg.mxu0
    %201 = vmatpush.msra.mxu0 0.0
    %202 = vmatpush.msra.mxu0 0.0
    %203 = vmatpush.msra.mxu0 0.0
    %204 = vmatpush.msra.mxu0 0.0
    %205 = vmatpush.msra.mxu0 0.0
    %206 = vmatpush.msra.mxu0 0.0
    %207 = vmatpush.msra.mxu0 0.0
    %208 = vmatpush.msra.mxu0 0.0
    %209 = vmatpush.msra.mxu0 0.0
    %210 = vmatpush.msra.mxu0 0.0
    %211 = vmatpush.msra.mxu0 0.0
    %212 = vmatpush.msra.mxu0 0.0
    %213 = vmatpush.msra.mxu0 %v96
    %214 = vmatpush.msra.mxu0 %v90
    %215 = vmatpush.msra.mxu0 %v84
    %216 = vmatpush.msra.mxu0 %v78
    %217 = vmatmul.f32.gmra.mxu0 %v99
    %v218 = vpop.f32.mrf.mxu0
    %v219 = vadd.f32 0.0, %v218
    %220 = vdwg.mxu0
    %v221 = vld [vmem:[#allocation4] sm:$0xff]
    %v222 = vld [vmem:[#allocation4 + $0x8] sm:$0xff]
    %v223 = vld [vmem:[#allocation4 + $0x10] sm:$0xff]
    %v224 = vld [vmem:[#allocation4 + $0x18] sm:$0xff]
    %v225 = vld [vmem:[#allocation4 + $0x20] sm:$0xff]
    %v226 = vld [vmem:[#allocation4 + $0x28] sm:$0xff]
    %v227 = vld [vmem:[#allocation4 + $0x30] sm:$0xff]
    %v228 = vld [vmem:[#allocation4 + $0x38] sm:$0xff]
    %v229 = vld [vmem:[#allocation4 + $0x40] sm:$0xff]
    %v230 = vld [vmem:[#allocation4 + $0x48] sm:$0xff]
    %v231 = vld [vmem:[#allocation4 + $0x50] sm:$0xff]
    %v232 = vld [vmem:[#allocation4 + $0x58] sm:$0xff]
    %v233 = vld [vmem:[#allocation4 + $0x60] sm:$0xff]
    %v234 = vld [vmem:[#allocation4 + $0x68] sm:$0xff]
    %v235 = vld [vmem:[#allocation4 + $0x70] sm:$0xff]
    %vm236 = vcmask 195584
    %v238 = vsel %vm236, %v71, 0
    %240 = vmatpush.msra.mxu0 0.0
    %241 = vmatpush.msra.mxu0 0.0
    %242 = vmatpush.msra.mxu0 0.0
    %243 = vmatpush.msra.mxu0 0.0
    %244 = vmatpush.msra.mxu0 0.0
    %245 = vmatpush.msra.mxu0 0.0
    %246 = vmatpush.msra.mxu0 0.0
    %247 = vmatpush.msra.mxu0 0.0
    %248 = vmatpush.msra.mxu0 0.0
    %249 = vmatpush.msra.mxu0 0.0
    %250 = vmatpush.msra.mxu0 0.0
    %251 = vmatpush.msra.mxu0 0.0
    %252 = vmatpush.msra.mxu0 0.0
    %253 = vmatpush.msra.mxu0 %v231
    %254 = vmatpush.msra.mxu0 %v226
    %255 = vmatpush.msra.mxu0 %v221
    %256 = vmatmul.f32.gmra.mxu0 %v238
    %v257 = vpop.f32.mrf.mxu0
    %v258 = vadd.f32 0.0, %v257
    %259 = vdwg.mxu0
    %260 = vmatpush.msra.mxu0 0.0
    %261 = vmatpush.msra.mxu0 0.0
    %262 = vmatpush.msra.mxu0 0.0
    %263 = vmatpush.msra.mxu0 0.0
    %264 = vmatpush.msra.mxu0 0.0
    %265 = vmatpush.msra.mxu0 0.0
    %266 = vmatpush.msra.mxu0 0.0
    %267 = vmatpush.msra.mxu0 0.0
    %268 = vmatpush.msra.mxu0 0.0
    %269 = vmatpush.msra.mxu0 0.0
    %270 = vmatpush.msra.mxu0 0.0
    %271 = vmatpush.msra.mxu0 0.0
    %272 = vmatpush.msra.mxu0 0.0
    %273 = vmatpush.msra.mxu0 %v232
    %274 = vmatpush.msra.mxu0 %v227
    %275 = vmatpush.msra.mxu0 %v222
    %276 = vmatmul.f32.gmra.mxu0 %v238
    %v277 = vpop.f32.mrf.mxu0
    %v278 = vadd.f32 0.0, %v277
    %279 = vdwg.mxu0
    %280 = vmatpush.msra.mxu0 0.0
    %281 = vmatpush.msra.mxu0 0.0
    %282 = vmatpush.msra.mxu0 0.0
    %283 = vmatpush.msra.mxu0 0.0
    %284 = vmatpush.msra.mxu0 0.0
    %285 = vmatpush.msra.mxu0 0.0
    %286 = vmatpush.msra.mxu0 0.0
    %287 = vmatpush.msra.mxu0 0.0
    %288 = vmatpush.msra.mxu0 0.0
    %289 = vmatpush.msra.mxu0 0.0
    %290 = vmatpush.msra.mxu0 0.0
    %291 = vmatpush.msra.mxu0 0.0
    %292 = vmatpush.msra.mxu0 0.0
    %293 = vmatpush.msra.mxu0 %v233
    %294 = vmatpush.msra.mxu0 %v228
    %295 = vmatpush.msra.mxu0 %v223
    %296 = vmatmul.f32.gmra.mxu0 %v238
    %v297 = vpop.f32.mrf.mxu0
    %v298 = vadd.f32 0.0, %v297
    %299 = vdwg.mxu0
    %300 = vmatpush.msra.mxu0 0.0
    %301 = vmatpush.msra.mxu0 0.0
    %302 = vmatpush.msra.mxu0 0.0
    %303 = vmatpush.msra.mxu0 0.0
    %304 = vmatpush.msra.mxu0 0.0
    %305 = vmatpush.msra.mxu0 0.0
    %306 = vmatpush.msra.mxu0 0.0
    %307 = vmatpush.msra.mxu0 0.0
    %308 = vmatpush.msra.mxu0 0.0
    %309 = vmatpush.msra.mxu0 0.0
    %310 = vmatpush.msra.mxu0 0.0
    %311 = vmatpush.msra.mxu0 0.0
    %312 = vmatpush.msra.mxu0 0.0
    %313 = vmatpush.msra.mxu0 %v234
    %314 = vmatpush.msra.mxu0 %v229
    %315 = vmatpush.msra.mxu0 %v224
    %316 = vmatmul.f32.gmra.mxu0 %v238
    %v317 = vpop.f32.mrf.mxu0
    %v318 = vadd.f32 0.0, %v317
    %319 = vdwg.mxu0
    %320 = vmatpush.msra.mxu0 0.0
    %321 = vmatpush.msra.mxu0 0.0
    %322 = vmatpush.msra.mxu0 0.0
    %323 = vmatpush.msra.mxu0 0.0
    %324 = vmatpush.msra.mxu0 0.0
    %325 = vmatpush.msra.mxu0 0.0
    %326 = vmatpush.msra.mxu0 0.0
    %327 = vmatpush.msra.mxu0 0.0
    %328 = vmatpush.msra.mxu0 0.0
    %329 = vmatpush.msra.mxu0 0.0
    %330 = vmatpush.msra.mxu0 0.0
    %331 = vmatpush.msra.mxu0 0.0
    %332 = vmatpush.msra.mxu0 0.0
    %333 = vmatpush.msra.mxu0 %v235
    %334 = vmatpush.msra.mxu0 %v230
    %335 = vmatpush.msra.mxu0 %v225
    %336 = vmatmul.f32.gmra.mxu0 %v238
    %v337 = vpop.f32.mrf.mxu0
    %v338 = vadd.f32 0.0, %v337
    %339 = vdwg.mxu0
    %v340 = vld [vmem:[#allocation6] sm:$0xff]
    %v341 = vld [vmem:[#allocation6 + $0x8] sm:$0xff]
    %vm342 = vcmask 130048
    %v344 = vsel %vm342, 0.0, 0
    %346 = vmatpush.msra.mxu0 0.0
    %347 = vmatpush.msra.mxu0 0.0
    %348 = vmatpush.msra.mxu0 0.0
    %349 = vmatpush.msra.mxu0 0.0
    %350 = vmatpush.msra.mxu0 0.0
    %351 = vmatpush.msra.mxu0 0.0
    %352 = vmatpush.msra.mxu0 0.0
    %353 = vmatpush.msra.mxu0 0.0
    %354 = vmatpush.msra.mxu0 0.0
    %355 = vmatpush.msra.mxu0 0.0
    %356 = vmatpush.msra.mxu0 0.0
    %357 = vmatpush.msra.mxu0 0.0
    %358 = vmatpush.msra.mxu0 0.0
    %359 = vmatpush.msra.mxu0 0.0
    %360 = vmatpush.msra.mxu0 %v341
    %361 = vmatpush.msra.mxu0 %v340
    %362 = vmatmul.f32.gmra.mxu0 %v344
    %v363 = vpop.f32.mrf.mxu0
    %v364 = vadd.f32 0.0, %v363
    %365 = vdwg.mxu0
    %v366 = vadd.f32 %v119, %v364
    %v367 = vxor.u32 %v366, 2147483648
    %v368 = vmul.f32 %v367, 1.442695
    %v369 = vpow.pop %v368
    %v370 = vadd.f32 %v369, 1.0
    %v371 = vrcp.pop %v370
    %v372 = vmul.f32 %v370, %v371
    %v373 = vsub.f32 1.0, %v372
    %v374 = vmul.f32 %v371, %v373
    %v375 = vadd.f32 %v371, %v374
    %vm376 = vweird.f32 %v370
    %vm377 = vweird.f32 %v371
    %vm378 = vmor %vm376, %vm377
    %v379 = vsel %vm378, %v371, %v375
    %v380 = vand.u32 2147483647, %v370
    %vm381 = vcmp.eq.f32.partialorder %v380, 8.507059e+37
    %v382 = vand.u32 %v370, 2147483648
    %v383 = vor.u32 1.1754944e-38, %v382
    %v384 = vsel %vm381, %v383, %v379
    %v385 = vmul.f32 1.0, %v384
    %v386 = vtanh.pop %v366
    %v387 = vmul.f32 %v385, 0.0
    %389 = vrot.lane.b32.xlu0 %v386, 96
    %v390 = vpop.permute.xlu0 %389
    %v392 = vmul.f32 %v385, %v390
    %394 = vrot.lane.b32.xlu0 %v392, 16
    %v395 = vpop.permute.xlu0 %394
    %v397 = vadd.f32 %v387, %v395
    %v398 = vtanh.pop %v397
    %400 = vrot.lane.b32.xlu0 %v398, 32
    %v401 = vpop.permute.xlu0 %400
    %v403 = vmul.f32 %v385, %v401
    %v404 = vadd.f32 %v139, %v258
    %406 = vrot.lane.b32.xlu0 %v403, 80
    %v407 = vpop.permute.xlu0 %406
    %v408 = vsel %vm342, %v407, 0
    %410 = vmatpush.msra.mxu0 0.0
    %411 = vmatpush.msra.mxu0 0.0
    %412 = vmatpush.msra.mxu0 0.0
    %413 = vmatpush.msra.mxu0 0.0
    %414 = vmatpush.msra.mxu0 0.0
    %415 = vmatpush.msra.mxu0 0.0
    %416 = vmatpush.msra.mxu0 0.0
    %417 = vmatpush.msra.mxu0 0.0
    %418 = vmatpush.msra.mxu0 0.0
    %419 = vmatpush.msra.mxu0 0.0
    %420 = vmatpush.msra.mxu0 0.0
    %421 = vmatpush.msra.mxu0 0.0
    %422 = vmatpush.msra.mxu0 0.0
    %423 = vmatpush.msra.mxu0 0.0
    %424 = vmatpush.msra.mxu0 %v341
    %425 = vmatpush.msra.mxu0 %v340
    %426 = vmatmul.f32.gmra.mxu0 %v408
    %v427 = vpop.f32.mrf.mxu0
    %v428 = vadd.f32 0.0, %v427
    %429 = vdwg.mxu0
    %v430 = vadd.f32 %v404, %v428
    %v431 = vxor.u32 %v430, 2147483648
    %v432 = vmul.f32 %v431, 1.442695
    %v433 = vpow.pop %v432
    %v434 = vadd.f32 %v433, 1.0
    %v435 = vrcp.pop %v434
    %v436 = vmul.f32 %v434, %v435
    %v437 = vsub.f32 1.0, %v436
    %v438 = vmul.f32 %v435, %v437
    %v439 = vadd.f32 %v435, %v438
    %vm440 = vweird.f32 %v434
    %vm441 = vweird.f32 %v435
    %vm442 = vmor %vm440, %vm441
    %v443 = vsel %vm442, %v435, %v439
    %v444 = vand.u32 2147483647, %v434
    %vm445 = vcmp.eq.f32.partialorder %v444, 8.507059e+37
    %v446 = vand.u32 %v434, 2147483648
    %v447 = vor.u32 1.1754944e-38, %v446
    %v448 = vsel %vm445, %v447, %v443
    %v449 = vmul.f32 1.0, %v448
    %v450 = vtanh.pop %v430
    %v451 = vmul.f32 %v449, %v397
    %453 = vrot.lane.b32.xlu0 %v450, 96
    %v454 = vpop.permute.xlu0 %453
    %v456 = vmul.f32 %v449, %v454
    %458 = vrot.lane.b32.xlu0 %v456, 16
    %v459 = vpop.permute.xlu0 %458
    %v461 = vadd.f32 %v451, %v459
    %v462 = vtanh.pop %v461
    %464 = vrot.lane.b32.xlu0 %v462, 32
    %v465 = vpop.permute.xlu0 %464
    %v467 = vmul.f32 %v449, %v465
    %v468 = vadd.f32 %v159, %v278
    %470 = vrot.lane.b32.xlu0 %v467, 80
    %v471 = vpop.permute.xlu0 %470
    %v472 = vsel %vm342, %v471, 0
    %474 = vmatpush.msra.mxu0 0.0
    %475 = vmatpush.msra.mxu0 0.0
    %476 = vmatpush.msra.mxu0 0.0
    %477 = vmatpush.msra.mxu0 0.0
    %478 = vmatpush.msra.mxu0 0.0
    %479 = vmatpush.msra.mxu0 0.0
    %480 = vmatpush.msra.mxu0 0.0
    %481 = vmatpush.msra.mxu0 0.0
    %482 = vmatpush.msra.mxu0 0.0
    %483 = vmatpush.msra.mxu0 0.0
    %484 = vmatpush.msra.mxu0 0.0
    %485 = vmatpush.msra.mxu0 0.0
    %486 = vmatpush.msra.mxu0 0.0
    %487 = vmatpush.msra.mxu0 0.0
    %488 = vmatpush.msra.mxu0 %v341
    %489 = vmatpush.msra.mxu0 %v340
    %490 = vmatmul.f32.gmra.mxu0 %v472
    %v491 = vpop.f32.mrf.mxu0
    %v492 = vadd.f32 0.0, %v491
    %493 = vdwg.mxu0
    %v494 = vadd.f32 %v468, %v492
    %v495 = vxor.u32 %v494, 2147483648
    %v496 = vmul.f32 %v495, 1.442695
    %v497 = vpow.pop %v496
    %v498 = vadd.f32 %v497, 1.0
    %v499 = vrcp.pop %v498
    %v500 = vmul.f32 %v498, %v499
    %v501 = vsub.f32 1.0, %v500
    %v502 = vmul.f32 %v499, %v501
    %v503 = vadd.f32 %v499, %v502
    %vm504 = vweird.f32 %v498
    %vm505 = vweird.f32 %v499
    %vm506 = vmor %vm504, %vm505
    %v507 = vsel %vm506, %v499, %v503
    %v508 = vand.u32 2147483647, %v498
    %vm509 = vcmp.eq.f32.partialorder %v508, 8.507059e+37
    %v510 = vand.u32 %v498, 2147483648
    %v511 = vor.u32 1.1754944e-38, %v510
    %v512 = vsel %vm509, %v511, %v507
    %v513 = vmul.f32 1.0, %v512
    %v514 = vtanh.pop %v494
    %v515 = vmul.f32 %v513, %v461
    %517 = vrot.lane.b32.xlu0 %v514, 96
    %v518 = vpop.permute.xlu0 %517
    %v520 = vmul.f32 %v513, %v518
    %522 = vrot.lane.b32.xlu0 %v520, 16
    %v523 = vpop.permute.xlu0 %522
    %v525 = vadd.f32 %v515, %v523
    %v526 = vtanh.pop %v525
    %528 = vrot.lane.b32.xlu0 %v526, 32
    %v529 = vpop.permute.xlu0 %528
    %v531 = vmul.f32 %v513, %v529
    %v532 = vadd.f32 %v179, %v298
    %534 = vrot.lane.b32.xlu0 %v531, 80
    %v535 = vpop.permute.xlu0 %534
    %v536 = vsel %vm342, %v535, 0
    %538 = vmatpush.msra.mxu0 0.0
    %539 = vmatpush.msra.mxu0 0.0
    %540 = vmatpush.msra.mxu0 0.0
    %541 = vmatpush.msra.mxu0 0.0
    %542 = vmatpush.msra.mxu0 0.0
    %543 = vmatpush.msra.mxu0 0.0
    %544 = vmatpush.msra.mxu0 0.0
    %545 = vmatpush.msra.mxu0 0.0
    %546 = vmatpush.msra.mxu0 0.0
    %547 = vmatpush.msra.mxu0 0.0
    %548 = vmatpush.msra.mxu0 0.0
    %549 = vmatpush.msra.mxu0 0.0
    %550 = vmatpush.msra.mxu0 0.0
    %551 = vmatpush.msra.mxu0 0.0
    %552 = vmatpush.msra.mxu0 %v341
    %553 = vmatpush.msra.mxu0 %v340
    %554 = vmatmul.f32.gmra.mxu0 %v536
    %v555 = vpop.f32.mrf.mxu0
    %v556 = vadd.f32 0.0, %v555
    %557 = vdwg.mxu0
    %v558 = vadd.f32 %v532, %v556
    %v559 = vxor.u32 %v558, 2147483648
    %v560 = vmul.f32 %v559, 1.442695
    %v561 = vpow.pop %v560
    %v562 = vadd.f32 %v561, 1.0
    %v563 = vrcp.pop %v562
    %v564 = vmul.f32 %v562, %v563
    %v565 = vsub.f32 1.0, %v564
    %v566 = vmul.f32 %v563, %v565
    %v567 = vadd.f32 %v563, %v566
    %vm568 = vweird.f32 %v562
    %vm569 = vweird.f32 %v563
    %vm570 = vmor %vm568, %vm569
    %v571 = vsel %vm570, %v563, %v567
    %v572 = vand.u32 2147483647, %v562
    %vm573 = vcmp.eq.f32.partialorder %v572, 8.507059e+37
    %v574 = vand.u32 %v562, 2147483648
    %v575 = vor.u32 1.1754944e-38, %v574
    %v576 = vsel %vm573, %v575, %v571
    %v577 = vmul.f32 1.0, %v576
    %v578 = vtanh.pop %v558
    %v579 = vmul.f32 %v577, %v525
    %581 = vrot.lane.b32.xlu0 %v578, 96
    %v582 = vpop.permute.xlu0 %581
    %v584 = vmul.f32 %v577, %v582
    %586 = vrot.lane.b32.xlu0 %v584, 16
    %v587 = vpop.permute.xlu0 %586
    %v589 = vadd.f32 %v579, %v587
    %v590 = vtanh.pop %v589
    %592 = vrot.lane.b32.xlu0 %v590, 32
    %v593 = vpop.permute.xlu0 %592
    %v595 = vmul.f32 %v577, %v593
    %v596 = vadd.f32 %v199, %v318
    %598 = vrot.lane.b32.xlu0 %v595, 80
    %v599 = vpop.permute.xlu0 %598
    %v600 = vsel %vm342, %v599, 0
    %602 = vmatpush.msra.mxu0 0.0
    %603 = vmatpush.msra.mxu0 0.0
    %604 = vmatpush.msra.mxu0 0.0
    %605 = vmatpush.msra.mxu0 0.0
    %606 = vmatpush.msra.mxu0 0.0
    %607 = vmatpush.msra.mxu0 0.0
    %608 = vmatpush.msra.mxu0 0.0
    %609 = vmatpush.msra.mxu0 0.0
    %610 = vmatpush.msra.mxu0 0.0
    %611 = vmatpush.msra.mxu0 0.0
    %612 = vmatpush.msra.mxu0 0.0
    %613 = vmatpush.msra.mxu0 0.0
    %614 = vmatpush.msra.mxu0 0.0
    %615 = vmatpush.msra.mxu0 0.0
    %616 = vmatpush.msra.mxu0 %v341
    %617 = vmatpush.msra.mxu0 %v340
    %618 = vmatmul.f32.gmra.mxu0 %v600
    %v619 = vpop.f32.mrf.mxu0
    %v620 = vadd.f32 0.0, %v619
    %621 = vdwg.mxu0
    %v622 = vadd.f32 %v596, %v620
    %v623 = vxor.u32 %v622, 2147483648
    %v624 = vmul.f32 %v623, 1.442695
    %v625 = vpow.pop %v624
    %v626 = vadd.f32 %v625, 1.0
    %v627 = vrcp.pop %v626
    %v628 = vmul.f32 %v626, %v627
    %v629 = vsub.f32 1.0, %v628
    %v630 = vmul.f32 %v627, %v629
    %v631 = vadd.f32 %v627, %v630
    %vm632 = vweird.f32 %v626
    %vm633 = vweird.f32 %v627
    %vm634 = vmor %vm632, %vm633
    %v635 = vsel %vm634, %v627, %v631
    %v636 = vand.u32 2147483647, %v626
    %vm637 = vcmp.eq.f32.partialorder %v636, 8.507059e+37
    %v638 = vand.u32 %v626, 2147483648
    %v639 = vor.u32 1.1754944e-38, %v638
    %v640 = vsel %vm637, %v639, %v635
    %v641 = vmul.f32 1.0, %v640
    %v642 = vtanh.pop %v622
    %v643 = vmul.f32 %v641, %v589
    %645 = vrot.lane.b32.xlu0 %v642, 96
    %v646 = vpop.permute.xlu0 %645
    %v648 = vmul.f32 %v641, %v646
    %650 = vrot.lane.b32.xlu0 %v648, 16
    %v651 = vpop.permute.xlu0 %650
    %v653 = vadd.f32 %v643, %v651
    %v654 = vtanh.pop %v653
    %656 = vrot.lane.b32.xlu0 %v654, 32
    %v657 = vpop.permute.xlu0 %656
    %v659 = vmul.f32 %v641, %v657
    %v660 = vadd.f32 %v219, %v338
    %v661 = vxor.u32 %v660, 2147483648
    %v662 = vmul.f32 %v661, 1.442695
    %v663 = vpow.pop %v662
    %v664 = vadd.f32 %v663, 1.0
    %v665 = vrcp.pop %v664
    %v666 = vmul.f32 %v664, %v665
    %v667 = vsub.f32 1.0, %v666
    %v668 = vmul.f32 %v665, %v667
    %v669 = vadd.f32 %v665, %v668
    %vm670 = vweird.f32 %v664
    %vm671 = vweird.f32 %v665
    %vm672 = vmor %vm670, %vm671
    %v673 = vsel %vm672, %v665, %v669
    %v674 = vand.u32 2147483647, %v664
    %vm675 = vcmp.eq.f32.partialorder %v674, 8.507059e+37
    %v676 = vand.u32 %v664, 2147483648
    %v677 = vor.u32 1.1754944e-38, %v676
    %v678 = vsel %vm675, %v677, %v673
    %v679 = vmul.f32 1.0, %v678
    %v680 = vtanh.pop %v660
    %682 = vrot.lane.b32.xlu0 %v680, 96
    %v683 = vpop.permute.xlu0 %682
    %v685 = vmul.f32 %v679, %v683
    %v686 = vtanh.pop %v685
    %688 = vrot.lane.b32.xlu0 %v686, 48
    %v689 = vpop.permute.xlu0 %688
    %v691 = vmul.f32 %v679, %v689
    %v692 = vld [vmem:[#allocation6 + $0x10] sm:$0xff]
    %v693 = vld [vmem:[#allocation6 + $0x18] sm:$0xff]
    %v694 = vld [vmem:[#allocation6 + $0x20] sm:$0xff]
    %v695 = vld [vmem:[#allocation6 + $0x28] sm:$0xff]
    %697 = vrot.lane.b32.xlu0 %v691, 80
    %v698 = vpop.permute.xlu0 %697
    %v699 = vsel %vm342, %v698, 0
    %701 = vmatpush.msra.mxu0 0.0
    %702 = vmatpush.msra.mxu0 0.0
    %703 = vmatpush.msra.mxu0 0.0
    %704 = vmatpush.msra.mxu0 0.0
    %705 = vmatpush.msra.mxu0 0.0
    %706 = vmatpush.msra.mxu0 0.0
    %707 = vmatpush.msra.mxu0 0.0
    %708 = vmatpush.msra.mxu0 0.0
    %709 = vmatpush.msra.mxu0 0.0
    %710 = vmatpush.msra.mxu0 0.0
    %711 = vmatpush.msra.mxu0 0.0
    %712 = vmatpush.msra.mxu0 0.0
    %713 = vmatpush.msra.mxu0 0.0
    %714 = vmatpush.msra.mxu0 0.0
    %715 = vmatpush.msra.mxu0 %v695
    %716 = vmatpush.msra.mxu0 %v694
    %717 = vmatmul.f32.gmra.mxu0 %v699
    %v718 = vpop.f32.mrf.mxu0
    %v719 = vadd.f32 0.0, %v718
    %720 = vdwg.mxu0
    %722 = vrot.lane.b32.xlu0 %v659, 80
    %v723 = vpop.permute.xlu0 %722
    %v724 = vsel %vm342, %v723, 0
    %726 = vmatpush.msra.mxu0 0.0
    %727 = vmatpush.msra.mxu0 0.0
    %728 = vmatpush.msra.mxu0 0.0
    %729 = vmatpush.msra.mxu0 0.0
    %730 = vmatpush.msra.mxu0 0.0
    %731 = vmatpush.msra.mxu0 0.0
    %732 = vmatpush.msra.mxu0 0.0
    %733 = vmatpush.msra.mxu0 0.0
    %734 = vmatpush.msra.mxu0 0.0
    %735 = vmatpush.msra.mxu0 0.0
    %736 = vmatpush.msra.mxu0 0.0
    %737 = vmatpush.msra.mxu0 0.0
    %738 = vmatpush.msra.mxu0 0.0
    %739 = vmatpush.msra.mxu0 0.0
    %740 = vmatpush.msra.mxu0 %v693
    %741 = vmatpush.msra.mxu0 %v692
    %742 = vmatmul.f32.gmra.mxu0 %v724
    %v743 = vpop.f32.mrf.mxu0
    %v744 = vadd.f32 %v719, %v743
    %745 = vdwg.mxu0
    %v746 = vld [vmem:[#allocation6 + $0x30] sm:$0xff]
    %v747 = vperm.slane %v746, 0
    %v748 = vadd.f32 %v744, %v747
    %v749 = vld [vmem:[#allocation6 + $0x38] sm:$0xff]
    %v750 = vld [vmem:[#allocation6 + $0x40] sm:$0xff]
    %v751 = vld [vmem:[#allocation6 + $0x48] sm:$0xff]
    %v752 = vld [vmem:[#allocation6 + $0x50] sm:$0xff]
    %v753 = vld [vmem:[#allocation6 + $0x58] sm:$0xff]
    %v754 = vld [vmem:[#allocation6 + $0x60] sm:$0xff]
    %v755 = vld [vmem:[#allocation6 + $0x68] sm:$0xff]
    %v756 = vld [vmem:[#allocation6 + $0x70] sm:$0xff]
    %v757 = vld [vmem:[#allocation6 + $0x78] sm:$0xff]
    %v758 = vld [vmem:[#allocation6 + $0x80] sm:$0xff]
    %v759 = vld [vmem:[#allocation6 + $0x88] sm:$0xff]
    %v760 = vld [vmem:[#allocation6 + $0x90] sm:$0xff]
    %v761 = vld [vmem:[#allocation6 + $0x98] sm:$0xff]
    %v762 = vld [vmem:[#allocation6 + $0xa0] sm:$0xff]
    %v763 = vld [vmem:[#allocation6 + $0xa8] sm:$0xff]
    %v764 = vld [vmem:[#allocation6 + $0xb0] sm:$0xff]
    %v765 = vld [vmem:[#allocation6 + $0xb8] sm:$0xff]
    %vm766 = vcmask 64512
    %v768 = vsel %vm766, %v72, 0
    %770 = vmatpush.msra.mxu0 0.0
    %771 = vmatpush.msra.mxu0 0.0
    %772 = vmatpush.msra.mxu0 0.0
    %773 = vmatpush.msra.mxu0 0.0
    %774 = vmatpush.msra.mxu0 0.0
    %775 = vmatpush.msra.mxu0 0.0
    %776 = vmatpush.msra.mxu0 0.0
    %777 = vmatpush.msra.mxu0 0.0
    %778 = vmatpush.msra.mxu0 0.0
    %779 = vmatpush.msra.mxu0 0.0
    %780 = vmatpush.msra.mxu0 0.0
    %781 = vmatpush.msra.mxu0 0.0
    %782 = vmatpush.msra.mxu0 0.0
    %783 = vmatpush.msra.mxu0 0.0
    %784 = vmatpush.msra.mxu0 0.0
    %785 = vmatpush.msra.mxu0 %v765
    %786 = vmatmul.f32.gmra.mxu0 %v768
    %v787 = vpop.f32.mrf.mxu0
    %v788 = vadd.f32 0.0, %v787
    %789 = vdwg.mxu0
    %790 = vmatpush.msra.mxu0 %v764
    %791 = vmatpush.msra.mxu0 %v763
    %792 = vmatpush.msra.mxu0 %v762
    %793 = vmatpush.msra.mxu0 %v761
    %794 = vmatpush.msra.mxu0 %v760
    %795 = vmatpush.msra.mxu0 %v759
    %796 = vmatpush.msra.mxu0 %v758
    %797 = vmatpush.msra.mxu0 %v757
    %798 = vmatpush.msra.mxu0 %v756
    %799 = vmatpush.msra.mxu0 %v755
    %800 = vmatpush.msra.mxu0 %v754
    %801 = vmatpush.msra.mxu0 %v753
    %802 = vmatpush.msra.mxu0 %v752
    %803 = vmatpush.msra.mxu0 %v751
    %804 = vmatpush.msra.mxu0 %v750
    %805 = vmatpush.msra.mxu0 %v749
    %806 = vmatmul.f32.gmra.mxu0 %v748
    %v807 = vpop.f32.mrf.mxu0
    %v808 = vadd.f32 %v788, %v807
    %809 = vdwg.mxu0
    %v810 = vld [vmem:[#allocation6 + $0xc0] sm:$0xff]
    %v811 = vperm.slane %v810, 0
    %v812 = vadd.f32 %v808, %v811
    %v813 = vmax.f32 %v812, 0.0
    %v814 = vld [vmem:[#allocation6 + $0xc8] sm:$0xff]
    %v815 = vld [vmem:[#allocation6 + $0xd0] sm:$0xff]
    %v816 = vld [vmem:[#allocation6 + $0xd8] sm:$0xff]
    %v817 = vld [vmem:[#allocation6 + $0xe0] sm:$0xff]
    %v818 = vld [vmem:[#allocation6 + $0xe8] sm:$0xff]
    %v819 = vld [vmem:[#allocation6 + $0xf0] sm:$0xff]
    %v820 = vld [vmem:[#allocation6 + $0xf8] sm:$0xff]
    %v821 = vld [vmem:[#allocation6 + $0x100] sm:$0xff]
    %v822 = vld [vmem:[#allocation6 + $0x108] sm:$0xff]
    %v823 = vld [vmem:[#allocation6 + $0x110] sm:$0xff]
    %v824 = vld [vmem:[#allocation6 + $0x118] sm:$0xff]
    %v825 = vld [vmem:[#allocation6 + $0x120] sm:$0xff]
    %v826 = vld [vmem:[#allocation6 + $0x128] sm:$0xff]
    %v827 = vld [vmem:[#allocation6 + $0x130] sm:$0xff]
    %v828 = vld [vmem:[#allocation6 + $0x138] sm:$0xff]
    %v829 = vld [vmem:[#allocation6 + $0x140] sm:$0xff]
    %v830 = vld [vmem:[#allocation6 + $0x148] sm:$0xff]
    %v831 = vperm.slane %v830, 0
    %832 = vmatpush.msra.mxu0 %v829
    %833 = vmatpush.msra.mxu0 %v828
    %834 = vmatpush.msra.mxu0 %v827
    %835 = vmatpush.msra.mxu0 %v826
    %836 = vmatpush.msra.mxu0 %v825
    %837 = vmatpush.msra.mxu0 %v824
    %838 = vmatpush.msra.mxu0 %v823
    %839 = vmatpush.msra.mxu0 %v822
    %840 = vmatpush.msra.mxu0 %v821
    %841 = vmatpush.msra.mxu0 %v820
    %842 = vmatpush.msra.mxu0 %v819
    %843 = vmatpush.msra.mxu0 %v818
    %844 = vmatpush.msra.mxu0 %v817
    %845 = vmatpush.msra.mxu0 %v816
    %846 = vmatpush.msra.mxu0 %v815
    %847 = vmatpush.msra.mxu0 %v814
    %848 = vmatmul.f32.gmra.mxu0 %v813
    %v849 = vpop.f32.mrf.mxu0
    %v850 = vadd.f32 %v831, %v849
    %851 = vdwg.mxu0
    %v852 = vmax.f32 %v850, 0.0
    %v853 = vld [vmem:[#allocation6 + $0x150] sm:$0xff]
    %v854 = vld [vmem:[#allocation6 + $0x158] sm:$0xff]
    %v855 = vld [vmem:[#allocation6 + $0x160] sm:$0xff]
    %v856 = vld [vmem:[#allocation6 + $0x168] sm:$0xff]
    %v857 = vld [vmem:[#allocation6 + $0x170] sm:$0xff]
    %v858 = vld [vmem:[#allocation6 + $0x178] sm:$0xff]
    %v859 = vld [vmem:[#allocation6 + $0x180] sm:$0xff]
    %v860 = vld [vmem:[#allocation6 + $0x188] sm:$0xff]
    %v861 = vld [vmem:[#allocation6 + $0x190] sm:$0xff]
    %v862 = vld [vmem:[#allocation6 + $0x198] sm:$0xff]
    %v863 = vld [vmem:[#allocation6 + $0x1a0] sm:$0xff]
    %v864 = vld [vmem:[#allocation6 + $0x1a8] sm:$0xff]
    %v865 = vld [vmem:[#allocation6 + $0x1b0] sm:$0xff]
    %v866 = vld [vmem:[#allocation6 + $0x1b8] sm:$0xff]
    %v867 = vld [vmem:[#allocation6 + $0x1c0] sm:$0xff]
    %v868 = vld [vmem:[#allocation6 + $0x1c8] sm:$0xff]
    %v869 = vld [vmem:[#allocation6 + $0x1d0] sm:$0xff]
    %v870 = vperm.slane %v869, 0
    %871 = vmatpush.msra.mxu0 %v868
    %872 = vmatpush.msra.mxu0 %v867
    %873 = vmatpush.msra.mxu0 %v866
    %874 = vmatpush.msra.mxu0 %v865
    %875 = vmatpush.msra.mxu0 %v864
    %876 = vmatpush.msra.mxu0 %v863
    %877 = vmatpush.msra.mxu0 %v862
    %878 = vmatpush.msra.mxu0 %v861
    %879 = vmatpush.msra.mxu0 %v860
    %880 = vmatpush.msra.mxu0 %v859
    %881 = vmatpush.msra.mxu0 %v858
    %882 = vmatpush.msra.mxu0 %v857
    %883 = vmatpush.msra.mxu0 %v856
    %884 = vmatpush.msra.mxu0 %v855
    %885 = vmatpush.msra.mxu0 %v854
    %886 = vmatpush.msra.mxu0 %v853
    %887 = vmatmul.f32.gmra.mxu0 %v852
    %v888 = vpop.f32.mrf.mxu0
    %v889 = vadd.f32 %v870, %v888
    %890 = vdwg.mxu0
    %891 = vst [vmem:[%s6] sm:$0xff] %v889
    // Predicated region
    $region38: #{fwd.1} parent=1 // pred_check
      _
    $region39: #{fwd.1} parent=1 // pred_check_branch
      %893 = sbr.rel (0) target = $region41
    $region40: #{fwd.1} parent=1 // pred_region
      _
    $region41: #{fwd.1} parent=1 // pred_fallthru
      _
    // Predicated region
    $region42: #{fwd.1} parent=1 // pred_check
      _
    $region43: #{fwd.1} parent=1 // pred_check_branch
      %895 = sbr.rel (0) target = $region45
    $region44: #{fwd.1} parent=1 // pred_region
      _
    $region45: #{fwd.1} parent=1 // pred_fallthru
      _
    %896 = vsyncpa [#allocation3], 1
    %897 = vsyncpa [#allocation5], 1

</llo_original>
